<compile_context>
chip_gen: v6e
topology: v6e:2x2x1
jax: 0.10.0
libtpu: 0.0.40
codegen_flags: <defaults>
</compile_context>

<pallas_src>
import jax
import jax.numpy as jnp
from jax.experimental import pallas as pl
from jax.experimental.pallas import tpu as pltpu


def _round_up(x, m):
    return ((x + m - 1) // m) * m


def _vmem_budget_bytes():
    """~3/4 of physical VMEM; conservative (v7x-sized) fallback if unqueryable."""
    cap = None
    try:
        info = pltpu.get_tpu_info()
        for attr in ("vmem_capacity_bytes", "vmem_size_bytes", "vmem_bytes"):
            cap = getattr(info, attr, None)
            if cap:
                break
    except Exception:
        cap = None
    if not cap:
        cap = 64 * 1024 * 1024
    return int(cap) * 3 // 4


def _pick_vocab_tile(V, kpad, batch_hint, budget):
    """Largest lane-dense (multiple-of-128) vocab tile whose working set fits VMEM."""
    v128 = _round_up(V, 128)
    logit_cache_bytes = batch_hint * v128 * 4  # worst case: f32 cache
    for tv in (8192, 4096, 2048, 1024, 512, 256, 128):
        if tv > v128:
            continue
        need = (
            2 * (kpad * tv * 2)                 # wcat tile, bf16, double-buffered
            + 2 * (tv * 4)                      # bcat tile
            + 2 * (batch_hint * tv * 4)         # output tile
            + 2 * (batch_hint * kpad * 2        # x (resident)
                   + kpad * kpad * 2            # w1 upper bound (resident)
                   + kpad * 4)                  # b1
            + batch_hint * kpad * 2             # [x|h] scratch
            + logit_cache_bytes                 # phase-0 logits cache
        )
        if need <= budget:
            return tv
    return 128


def nnlm_kernel(x_ref, w1_ref, b1_ref, wcat_ref, bcat_ref, o_ref,
                xh_ref, logit_ref, m_ref, l_ref, lse_ref):
    # x_ref    : [B, Dp]      bf16   (Dp = D padded to 128)
    # w1_ref   : [Dp, Hp]     bf16, b1_ref: [1, Hp] f32
    # wcat_ref : [Kp, TV]     bf16   (= [W3; W2] vocab tile, Kp = Dp + Hp)
    # bcat_ref : [1, TV]      f32    (= b2 + b3 vocab tile; padded cols = -1e30)
    # o_ref    : [B, TV]      f32    output tile (log-probs), written in phase 1 only
    # scratch  : xh [B, Kp] bf16, logit [NV, B, TV], m/l/lse [B, 1] f32
    phase = pl.program_id(0)   # 0: logits + online max/sum-exp, 1: normalize
    vt = pl.program_id(1)      # vocab-tile index
    nvt = pl.num_programs(1)
    dp = x_ref.shape[1]        # static

    # One-time work at the very first grid step: hidden layer + pack [x | hidden]
    # contiguously (lane-aligned slice stores) so logits are one K=(Dp+Hp) matmul.
    @pl.when((phase == 0) & (vt == 0))
    def _():
        h = jnp.tanh(
            jnp.dot(x_ref[...], w1_ref[...], preferred_element_type=jnp.float32)
            + b1_ref[...]
        )
        xh_ref[:, :dp] = x_ref[...]
        xh_ref[:, dp:] = h.astype(xh_ref.dtype)
        m_ref[...] = jnp.full_like(m_ref, -jnp.inf)
        l_ref[...] = jnp.zeros_like(l_ref)

    @pl.when(phase == 0)
    def _():
        # Fused logits for this vocab tile: [x | hidden] @ [W3; W2] + (b2 + b3).
        logits = (
            jnp.dot(xh_ref[...], wcat_ref[...], preferred_element_type=jnp.float32)
            + bcat_ref[...]
        )
        logit_ref[vt] = logits.astype(logit_ref.dtype)   # cache for phase 1

        tile_max = jnp.max(logits, axis=-1, keepdims=True)
        m_new = jnp.maximum(m_ref[...], tile_max)
        l_ref[...] = (
            l_ref[...] * jnp.exp(m_ref[...] - m_new)
            + jnp.sum(jnp.exp(logits - m_new), axis=-1, keepdims=True)
        )
        m_ref[...] = m_new

        @pl.when(vt == nvt - 1)
        def _():
            lse_ref[...] = m_ref[...] + jnp.log(l_ref[...])

    @pl.when(phase == 1)
    def _():
        o_ref[...] = logit_ref[vt].astype(jnp.float32) - lse_ref[...]


def prepare_params(params, batch_hint=128):
    """One-time weight preparation (hoisted out of the per-call forward path)."""
    emb = params["embeds"]               # [V, word_dim] f32
    w1, b1 = params["w1"], params["b1"]  # [D, H], [1, H]
    w2, b2 = params["w2"], params["b2"]  # [H, V], [1, V]
    w3, b3 = params["w3"], params["b3"]  # [D, V], [1, V]

    D, H = w1.shape
    V = w2.shape[1]
    Dp, Hp = _round_up(D, 128), _round_up(H, 128)
    Kp = Dp + Hp

    budget = _vmem_budget_bytes()
    TV = _pick_vocab_tile(V, Kp, batch_hint, budget)
    Vp = _round_up(V, TV)

    # Hidden weight padded to lane-aligned [Dp, Hp]; zero padding keeps tanh(pad)=0,
    # which is harmless because the matching wcat rows are zero.
    w1_p = jnp.zeros((Dp, Hp), jnp.bfloat16).at[:D, :H].set(w1.astype(jnp.bfloat16))
    b1_p = jnp.zeros((1, Hp), jnp.float32).at[:, :H].set(b1.astype(jnp.float32))

    # Fused logits weight [W3; W2] -> [Kp, Vp] bf16; padded rows/cols are zero.
    wcat = jnp.zeros((Kp, Vp), jnp.bfloat16)
    wcat = wcat.at[:D, :V].set(w3.astype(jnp.bfloat16))
    wcat = wcat.at[Dp:Dp + H, :V].set(w2.astype(jnp.bfloat16))
    # Fused bias; padded vocab columns get a huge negative so they vanish in softmax.
    bcat = jnp.full((1, Vp), -1e30, jnp.float32).at[:, :V].set(
        (b2 + b3).astype(jnp.float32))

    # TODO(synk): opt-in fp8 (v7x) / int8 (v6e) wcat with fused dequant would halve
    # the dominant HBM read again; needs accuracy validation so not enabled here.
    return {
        "embeds_bf": emb.astype(jnp.bfloat16),
        "w1_p": w1_p, "b1_p": b1_p, "wcat": wcat, "bcat": bcat,
        "D": D, "Dp": Dp, "Hp": Hp, "Kp": Kp,
        "V": V, "Vp": Vp, "TV": TV,
        "word_dim": emb.shape[1],
        "vmem_budget": budget,
    }


def nnlm_forward(x_idx, prep):
    """x_idx: int32 [B, win_size]; returns log-probs [B, vocab_size] (float32)."""
    B, _ = x_idx.shape
    D, Dp, Hp, Kp = prep["D"], prep["Dp"], prep["Hp"], prep["Kp"]
    V, Vp, TV = prep["V"], prep["Vp"], prep["TV"]
    NV = Vp // TV

    # Embedding gather directly in bf16 + zero-pad the flattened window to Dp lanes.
    # TODO(synk): move the gather in-kernel (PrefetchScalarGridSpec + pl.Element row
    # gather) if the XLA gather ever matters at larger batch sizes.
    xf = jnp.take(prep["embeds_bf"], x_idx, axis=0).reshape(B, D)
    xf = jnp.pad(xf, ((0, 0), (0, Dp - D)))

    # Logits-cache dtype: f32 unless B*Vp*4 would eat too much of the VMEM budget
    # (keeps the phase-1 dedup viable on v7x's smaller VMEM).
    cache_dtype = jnp.float32
    if B * Vp * 4 > prep["vmem_budget"] // 4:
        cache_dtype = jnp.bfloat16

    cost = pl.CostEstimate(
        flops=2 * B * Dp * Hp + 2 * B * Kp * Vp,            # logits computed once
        transcendentals=B * Hp + B * Vp + B,                # tanh + exp + log
        bytes_accessed=(2 * (B * Dp + Dp * Hp + Kp * Vp)    # bf16 operands, read once
                        + 4 * (Hp + Vp)                     # f32 biases
                        + 4 * B * Vp),                      # f32 output, written once
    )

    # Weight tiles stream only in phase 0; during phase 1 the index is pinned to the
    # last-resident tile so no wcat/bcat re-DMA happens.
    w_idx = lambda p, v: (0, v * (1 - p) + (NV - 1) * p)

    grid_spec = pltpu.PrefetchScalarGridSpec(
        num_scalar_prefetch=0,
        grid=(2, NV),
        in_specs=[
            pl.BlockSpec((B, Dp), lambda p, v: (0, 0)),     # resident across grid
            pl.BlockSpec((Dp, Hp), lambda p, v: (0, 0)),
            pl.BlockSpec((1, Hp), lambda p, v: (0, 0)),
            pl.BlockSpec((Kp, TV), w_idx),                  # vocab-tiled fused weight
            pl.BlockSpec((1, TV), w_idx),
        ],
        # Phase-0 steps collapse onto one dummy output block (never written there);
        # phase 1 streams each real output tile to HBM exactly once.
        out_specs=pl.BlockSpec((B, TV), lambda p, v: (0, v * p)),
        scratch_shapes=[
            pltpu.VMEM((B, Kp), jnp.bfloat16),      # [x | hidden], lane-aligned halves
            pltpu.VMEM((NV, B, TV), cache_dtype),   # phase-0 logits cache
            pltpu.VMEM((B, 1), jnp.float32),        # running max
            pltpu.VMEM((B, 1), jnp.float32),        # running sum-exp
            pltpu.VMEM((B, 1), jnp.float32),        # logsumexp
        ],
    )

    out = pl.pallas_call(
        nnlm_kernel,
        out_shape=jax.ShapeDtypeStruct((B, Vp), jnp.float32),
        grid_spec=grid_spec,
        compiler_params=pltpu.CompilerParams(
            # Both axes carry cross-step state (phase ordering / online softmax),
            # so they must stay "arbitrary" (single sequential traversal).
            # TODO(synk): v7x megacore variant would make the vocab axis "parallel"
            # with per-core accumulators and a cross-core lse combine.
            dimension_semantics=("arbitrary", "arbitrary"),
            vmem_limit_bytes=min(prep["vmem_budget"], 128 * 1024 * 1024),
        ),
        cost_estimate=cost,
    )(xf, prep["w1_p"], prep["b1_p"], prep["wcat"], prep["bcat"])
    return out[:, :V]


def init_params(key, vocab_size, word_dim, win_size, hidden_num):
    D = win_size * word_dim
    ks = jax.random.split(key, 7)

    def lin_w(k, fan_in, shape):
        bound = 1.0 / jnp.sqrt(fan_in)
        return jax.random.uniform(k, shape, jnp.float32, -bound, bound)

    return {
        "embeds": jax.random.normal(ks[0], (vocab_size, word_dim), jnp.float32),
        "w1": lin_w(ks[1], D, (D, hidden_num)),
        "b1": lin_w(ks[2], D, (1, hidden_num)),
        "w2": lin_w(ks[3], hidden_num, (hidden_num, vocab_size)),
        "b2": lin_w(ks[4], hidden_num, (1, vocab_size)),
        "w3": lin_w(ks[5], D, (D, vocab_size)),
        "b3": lin_w(ks[6], D, (1, vocab_size)),
    }


def nnlm_reference(x_idx, params, match_kernel_precision=False):
    emb = params["embeds"]
    B, win = x_idx.shape
    D = win * emb.shape[1]
    xf = jnp.take(emb, x_idx, axis=0).reshape(B, D).astype(jnp.float32)
    if match_kernel_precision:
        xb = xf.astype(jnp.bfloat16)
        w1 = params["w1"].astype(jnp.bfloat16)
        h = jnp.tanh(jnp.dot(xb, w1, preferred_element_type=jnp.float32) + params["b1"])
        xh = jnp.concatenate([xb, h.astype(jnp.bfloat16)], axis=1)
        wcat = jnp.concatenate([params["w3"], params["w2"]], axis=0).astype(jnp.bfloat16)
        logits = (jnp.dot(xh, wcat, preferred_element_type=jnp.float32)
                  + params["b2"] + params["b3"])
    else:
        h = jnp.tanh(xf @ params["w1"] + params["b1"])
        logits = h @ params["w2"] + params["b2"] + xf @ params["w3"] + params["b3"]
    return jax.nn.log_softmax(logits, axis=1)


if __name__ == "__main__":
    vocab_size, word_dim, win_size, hidden_num = 128, 8, 4, 32
    batch = 8

    key = jax.random.PRNGKey(0)
    k_param, k_x = jax.random.split(key)
    params = init_params(k_param, vocab_size, word_dim, win_size, hidden_num)
    x_idx = jax.random.randint(k_x, (batch, win_size), 0, vocab_size, jnp.int32)

    # One-time weight prep (pad / concat / cast) — hoisted out of the forward path.
    prep = prepare_params(params, batch_hint=batch)

    out = jax.block_until_ready(nnlm_forward(x_idx, prep))
    assert out.shape == (batch, vocab_size)

    # Matched-precision reference (same bf16 matmul operands, f32 accumulation).
    ref_bf = nnlm_reference(x_idx, params, match_kernel_precision=True)
    assert jnp.allclose(out, ref_bf, atol=1e-2, rtol=1e-2), "mismatch vs bf16-matched ref"

    # Full-f32 module semantics (looser tolerance accounts for bf16 weights).
    ref_f32 = nnlm_reference(x_idx, params, match_kernel_precision=False)
    assert jnp.allclose(out, ref_f32, atol=6e-2, rtol=6e-2), "mismatch vs f32 ref"

    # Log-probs must exponentiate to a distribution.
    assert jnp.allclose(jnp.sum(jnp.exp(out), axis=1), 1.0, atol=1e-3)

    print("KERNEL_OK")
</pallas_src>

<mosaic_0001>
module attributes {stable_mosaic.version = 11 : i64} {
  func.func @nnlm_kernel(%arg0: i32, %arg1: i32, %arg2: memref<8x128xbf16, #tpu.memory_space<vmem>>, %arg3: memref<128x128xbf16, #tpu.memory_space<vmem>>, %arg4: memref<1x128xf32, #tpu.memory_space<vmem>>, %arg5: memref<256x128xbf16, #tpu.memory_space<vmem>>, %arg6: memref<1x128xf32, #tpu.memory_space<vmem>>, %arg7: memref<8x128xf32, #tpu.memory_space<vmem>>, %arg8: memref<8x256xbf16, #tpu.memory_space<vmem>>, %arg9: memref<1x8x128xf32, #tpu.memory_space<vmem>>, %arg10: memref<8x1xf32, #tpu.memory_space<vmem>>, %arg11: memref<8x1xf32, #tpu.memory_space<vmem>>, %arg12: memref<8x1xf32, #tpu.memory_space<vmem>>) attributes {dimension_semantics = [#tpu.dimension_semantics<arbitrary>, #tpu.dimension_semantics<arbitrary>], iteration_bounds = array<i64: 2, 1>, scalar_prefetch = 0 : i64, scratch_operands = 5 : i64, tpu.core_type = #tpu.core_type<tc>, window_params = [{pipeline_mode = #tpu.pipeline_mode<synchronous>, transform_indices = @transform_0, window_bounds = array<i64: 8, 128>}, {pipeline_mode = #tpu.pipeline_mode<synchronous>, transform_indices = @transform_1, window_bounds = array<i64: 128, 128>}, {pipeline_mode = #tpu.pipeline_mode<synchronous>, transform_indices = @transform_2, window_bounds = array<i64: 1, 128>}, {transform_indices = @transform_3, window_bounds = array<i64: 256, 128>}, {transform_indices = @transform_4, window_bounds = array<i64: 1, 128>}, {transform_indices = @transform_5, window_bounds = array<i64: 8, 128>}]} {
    %c0_i32 = arith.constant 0 : i32
    %0 = arith.cmpi eq, %arg0, %c0_i32 : i32
    %c0_i32_0 = arith.constant 0 : i32
    %1 = arith.cmpi eq, %arg1, %c0_i32_0 : i32
    %2 = arith.andi %0, %1 : i1
    %3 = arith.extui %2 : i1 to i32
    %c0_i32_1 = arith.constant 0 : i32
    %4 = arith.cmpi ne, %3, %c0_i32_1 : i32
    scf.if %4 {
      %c0 = arith.constant 0 : index
      %c0_5 = arith.constant 0 : index
      %11 = vector.load %arg2[%c0, %c0_5] : memref<8x128xbf16, #tpu.memory_space<vmem>>, vector<8x128xbf16>
      %c0_6 = arith.constant 0 : index
      %c0_7 = arith.constant 0 : index
      %12 = vector.load %arg3[%c0_6, %c0_7] : memref<128x128xbf16, #tpu.memory_space<vmem>>, vector<128x128xbf16>
      %cst = arith.constant dense<0.000000e+00> : vector<8x128xf32>
      %13 = tpu.matmul %11, %12, %cst {dimension_numbers = #tpu.dot_dimension_numbers<[1], [0], [0], [1], [0, 0, 1, 1], [], []>} : vector<8x128xbf16>, vector<128x128xbf16>, vector<8x128xf32> -> vector<8x128xf32>
      %c0_8 = arith.constant 0 : index
      %c0_9 = arith.constant 0 : index
      %14 = vector.load %arg4[%c0_8, %c0_9] : memref<1x128xf32, #tpu.memory_space<vmem>>, vector<1x128xf32>
      %15 = vector.broadcast %14 : vector<1x128xf32> to vector<8x128xf32>
      %16 = arith.addf %13, %15 : vector<8x128xf32>
      %17 = math.tanh %16 : vector<8x128xf32>
      %c0_10 = arith.constant 0 : index
      %c0_11 = arith.constant 0 : index
      %18 = vector.load %arg2[%c0_10, %c0_11] : memref<8x128xbf16, #tpu.memory_space<vmem>>, vector<8x128xbf16>
      %c0_12 = arith.constant 0 : index
      %c0_13 = arith.constant 0 : index
      %19 = vector.load %arg8[%c0_12, %c0_13] : memref<8x256xbf16, #tpu.memory_space<vmem>>, vector<8x128xbf16>
      tpu.vector_store %arg8[%c0_12, %c0_13], %18 {strides = array<i32>} : memref<8x256xbf16, #tpu.memory_space<vmem>>, vector<8x128xbf16>,
      %20 = arith.truncf %17 : vector<8x128xf32> to vector<8x128xbf16>
      %c0_14 = arith.constant 0 : index
      %c128 = arith.constant 128 : index
      %21 = vector.load %arg8[%c0_14, %c128] : memref<8x256xbf16, #tpu.memory_space<vmem>>, vector<8x128xbf16>
      tpu.vector_store %arg8[%c0_14, %c128], %20 {strides = array<i32>} : memref<8x256xbf16, #tpu.memory_space<vmem>>, vector<8x128xbf16>,
      %cst_15 = arith.constant 0xFF800000 : f32
      %22 = vector.broadcast %cst_15 : f32 to vector<8x1xf32>
      %c0_16 = arith.constant 0 : index
      %c0_17 = arith.constant 0 : index
      %23 = vector.load %arg10[%c0_16, %c0_17] : memref<8x1xf32, #tpu.memory_space<vmem>>, vector<8x1xf32>
      tpu.vector_store %arg10[%c0_16, %c0_17], %22 {strides = array<i32>} : memref<8x1xf32, #tpu.memory_space<vmem>>, vector<8x1xf32>,
      %cst_18 = arith.constant 0.000000e+00 : f32
      %24 = vector.broadcast %cst_18 : f32 to vector<8x1xf32>
      %c0_19 = arith.constant 0 : index
      %c0_20 = arith.constant 0 : index
      %25 = vector.load %arg11[%c0_19, %c0_20] : memref<8x1xf32, #tpu.memory_space<vmem>>, vector<8x1xf32>
      tpu.vector_store %arg11[%c0_19, %c0_20], %24 {strides = array<i32>} : memref<8x1xf32, #tpu.memory_space<vmem>>, vector<8x1xf32>,
    } else {
    }
    %c0_i32_2 = arith.constant 0 : i32
    %5 = arith.cmpi eq, %arg0, %c0_i32_2 : i32
    %6 = arith.extui %5 : i1 to i32
    %c0_i32_3 = arith.constant 0 : i32
    %7 = arith.cmpi ne, %6, %c0_i32_3 : i32
    scf.if %7 {
      %c0 = arith.constant 0 : index
      %c0_5 = arith.constant 0 : index
      %11 = vector.load %arg8[%c0, %c0_5] : memref<8x256xbf16, #tpu.memory_space<vmem>>, vector<8x256xbf16>
      %c0_6 = arith.constant 0 : index
      %c0_7 = arith.constant 0 : index
      %12 = vector.load %arg5[%c0_6, %c0_7] : memref<256x128xbf16, #tpu.memory_space<vmem>>, vector<256x128xbf16>
      %cst = arith.constant dense<0.000000e+00> : vector<8x128xf32>
      %13 = tpu.matmul %11, %12, %cst {dimension_numbers = #tpu.dot_dimension_numbers<[1], [0], [0], [1], [0, 0, 1, 1], [], []>} : vector<8x256xbf16>, vector<256x128xbf16>, vector<8x128xf32> -> vector<8x128xf32>
      %c0_8 = arith.constant 0 : index
      %c0_9 = arith.constant 0 : index
      %14 = vector.load %arg6[%c0_8, %c0_9] : memref<1x128xf32, #tpu.memory_space<vmem>>, vector<1x128xf32>
      %15 = vector.broadcast %14 : vector<1x128xf32> to vector<8x128xf32>
      %16 = arith.addf %13, %15 : vector<8x128xf32>
      %17 = arith.index_cast %arg1 : i32 to index
      %c0_10 = arith.constant 0 : index
      %c0_11 = arith.constant 0 : index
      %18 = vector.load %arg9[%17, %c0_10, %c0_11] : memref<1x8x128xf32, #tpu.memory_space<vmem>>, vector<1x8x128xf32>
      %19 = vector.shape_cast %18 : vector<1x8x128xf32> to vector<8x128xf32>
      %20 = vector.shape_cast %16 : vector<8x128xf32> to vector<1x8x128xf32>
      tpu.vector_store %arg9[%17, %c0_10, %c0_11], %20 {strides = array<i32>} : memref<1x8x128xf32, #tpu.memory_space<vmem>>, vector<1x8x128xf32>,
      %cst_12 = arith.constant dense<0xFF800000> : vector<8xf32>
      %21 = vector.multi_reduction <maximumf>, %16, %cst_12 [1] : vector<8x128xf32> to vector<8xf32>
      %22 = vector.shape_cast %21 : vector<8xf32> to vector<8x1xf32>
      %c0_13 = arith.constant 0 : index
      %c0_14 = arith.constant 0 : index
      %23 = vector.load %arg10[%c0_13, %c0_14] : memref<8x1xf32, #tpu.memory_space<vmem>>, vector<8x1xf32>
      %24 = arith.maximumf %23, %22 : vector<8x1xf32>
      %c0_15 = arith.constant 0 : index
      %c0_16 = arith.constant 0 : index
      %25 = vector.load %arg11[%c0_15, %c0_16] : memref<8x1xf32, #tpu.memory_space<vmem>>, vector<8x1xf32>
      %c0_17 = arith.constant 0 : index
      %c0_18 = arith.constant 0 : index
      %26 = vector.load %arg10[%c0_17, %c0_18] : memref<8x1xf32, #tpu.memory_space<vmem>>, vector<8x1xf32>
      %27 = arith.subf %26, %24 : vector<8x1xf32>
      %28 = math.exp %27 : vector<8x1xf32>
      %29 = arith.mulf %25, %28 : vector<8x1xf32>
      %30 = vector.broadcast %24 : vector<8x1xf32> to vector<8x128xf32>
      %31 = arith.subf %16, %30 : vector<8x128xf32>
      %32 = math.exp %31 : vector<8x128xf32>
      %cst_19 = arith.constant dense<0.000000e+00> : vector<8xf32>
      %33 = vector.multi_reduction <add>, %32, %cst_19 [1] : vector<8x128xf32> to vector<8xf32>
      %34 = vector.shape_cast %33 : vector<8xf32> to vector<8x1xf32>
      %35 = arith.addf %29, %34 : vector<8x1xf32>
      %c0_20 = arith.constant 0 : index
      %c0_21 = arith.constant 0 : index
      %36 = vector.load %arg11[%c0_20, %c0_21] : memref<8x1xf32, #tpu.memory_space<vmem>>, vector<8x1xf32>
      tpu.vector_store %arg11[%c0_20, %c0_21], %35 {strides = array<i32>} : memref<8x1xf32, #tpu.memory_space<vmem>>, vector<8x1xf32>,
      %c0_22 = arith.constant 0 : index
      %c0_23 = arith.constant 0 : index
      %37 = vector.load %arg10[%c0_22, %c0_23] : memref<8x1xf32, #tpu.memory_space<vmem>>, vector<8x1xf32>
      tpu.vector_store %arg10[%c0_22, %c0_23], %24 {strides = array<i32>} : memref<8x1xf32, #tpu.memory_space<vmem>>, vector<8x1xf32>,
      %c0_i32_24 = arith.constant 0 : i32
      %38 = arith.cmpi eq, %arg1, %c0_i32_24 : i32
      %39 = arith.extui %38 : i1 to i32
      %c0_i32_25 = arith.constant 0 : i32
      %40 = arith.cmpi ne, %39, %c0_i32_25 : i32
      scf.if %40 {
        %c0_26 = arith.constant 0 : index
        %c0_27 = arith.constant 0 : index
        %41 = vector.load %arg10[%c0_26, %c0_27] : memref<8x1xf32, #tpu.memory_space<vmem>>, vector<8x1xf32>
        %c0_28 = arith.constant 0 : index
        %c0_29 = arith.constant 0 : index
        %42 = vector.load %arg11[%c0_28, %c0_29] : memref<8x1xf32, #tpu.memory_space<vmem>>, vector<8x1xf32>
        %43 = math.log %42 : vector<8x1xf32>
        %44 = arith.addf %41, %43 : vector<8x1xf32>
        %c0_30 = arith.constant 0 : index
        %c0_31 = arith.constant 0 : index
        %45 = vector.load %arg12[%c0_30, %c0_31] : memref<8x1xf32, #tpu.memory_space<vmem>>, vector<8x1xf32>
        tpu.vector_store %arg12[%c0_30, %c0_31], %44 {strides = array<i32>} : memref<8x1xf32, #tpu.memory_space<vmem>>, vector<8x1xf32>,
      } else {
      }
    } else {
    }
    %c1_i32 = arith.constant 1 : i32
    %8 = arith.cmpi eq, %arg0, %c1_i32 : i32
    %9 = arith.extui %8 : i1 to i32
    %c0_i32_4 = arith.constant 0 : i32
    %10 = arith.cmpi ne, %9, %c0_i32_4 : i32
    scf.if %10 {
      %11 = arith.index_cast %arg1 : i32 to index
      %c0 = arith.constant 0 : index
      %c0_5 = arith.constant 0 : index
      %12 = vector.load %arg9[%11, %c0, %c0_5] : memref<1x8x128xf32, #tpu.memory_space<vmem>>, vector<1x8x128xf32>
      %13 = vector.shape_cast %12 : vector<1x8x128xf32> to vector<8x128xf32>
      %c0_6 = arith.constant 0 : index
      %c0_7 = arith.constant 0 : index
      %14 = vector.load %arg12[%c0_6, %c0_7] : memref<8x1xf32, #tpu.memory_space<vmem>>, vector<8x1xf32>
      %15 = vector.broadcast %14 : vector<8x1xf32> to vector<8x128xf32>
      %16 = arith.subf %13, %15 : vector<8x128xf32>
      %c0_8 = arith.constant 0 : index
      %c0_9 = arith.constant 0 : index
      %17 = vector.load %arg7[%c0_8, %c0_9] : memref<8x128xf32, #tpu.memory_space<vmem>>, vector<8x128xf32>
      tpu.vector_store %arg7[%c0_8, %c0_9], %16 {strides = array<i32>} : memref<8x128xf32, #tpu.memory_space<vmem>>, vector<8x128xf32>,
    } else {
    }
    return
  }
  func.func @transform_0(%arg0: i32, %arg1: i32) -> (i32, i32) {
    %c0_i32 = arith.constant 0 : i32
    %c0_i32_0 = arith.constant 0 : i32
    %c0_i32_1 = arith.constant 0 : i32
    return %c0_i32, %c0_i32_0 : i32, i32
  }
  func.func @transform_1(%arg0: i32, %arg1: i32) -> (i32, i32) {
    %c0_i32 = arith.constant 0 : i32
    %c0_i32_0 = arith.constant 0 : i32
    %c0_i32_1 = arith.constant 0 : i32
    return %c0_i32, %c0_i32_0 : i32, i32
  }
  func.func @transform_2(%arg0: i32, %arg1: i32) -> (i32, i32) {
    %c0_i32 = arith.constant 0 : i32
    %c0_i32_0 = arith.constant 0 : i32
    %c0_i32_1 = arith.constant 0 : i32
    return %c0_i32, %c0_i32_0 : i32, i32
  }
  func.func @transform_3(%arg0: i32, %arg1: i32) -> (i32, i32) {
    %c1_i32 = arith.constant 1 : i32
    %0 = arith.subi %c1_i32, %arg0 : i32
    %1 = arith.muli %arg1, %0 : i32
    %c0_i32 = arith.constant 0 : i32
    %2 = arith.muli %c0_i32, %arg0 : i32
    %3 = arith.addi %1, %2 : i32
    %c0_i32_0 = arith.constant 0 : i32
    %c0_i32_1 = arith.constant 0 : i32
    return %c0_i32_0, %3 : i32, i32
  }
  func.func @transform_4(%arg0: i32, %arg1: i32) -> (i32, i32) {
    %c1_i32 = arith.constant 1 : i32
    %0 = arith.subi %c1_i32, %arg0 : i32
    %1 = arith.muli %arg1, %0 : i32
    %c0_i32 = arith.constant 0 : i32
    %2 = arith.muli %c0_i32, %arg0 : i32
    %3 = arith.addi %1, %2 : i32
    %c0_i32_0 = arith.constant 0 : i32
    %c0_i32_1 = arith.constant 0 : i32
    return %c0_i32_0, %3 : i32, i32
  }
  func.func @transform_5(%arg0: i32, %arg1: i32) -> (i32, i32) {
    %0 = arith.muli %arg1, %arg0 : i32
    %c0_i32 = arith.constant 0 : i32
    %c0_i32_0 = arith.constant 0 : i32
    return %c0_i32, %0 : i32, i32
  }
}

</mosaic_0001>

<llo_original>
// kernel: tpu_custom_call.1
$region0: #{tpu_custom_call.1}
  #allocation0 [shape = 'u32[]', space=smem, size = 0x4, offset = 0x4, fixed_abs, tag = 'smem constant byte address 0x4 - core index']
  #allocation1 [shape = 'u32[144,128]{1,0:T(1,128)}', space=vmem, size = 0x12000, scoped, tag = 'internal scratch']
  #allocation2 [shape = 'bf16[8,256]{1,0:T(8,128)(2,1)}', space=vmem, size = 0x1000, scoped, tag = 'scratch operand']
  #allocation3 [shape = 'f32[1,8,128]{2,1,0:T(8,128)}', space=vmem, size = 0x1000, scoped, tag = 'scratch operand']
  #allocation4 [shape = 'f32[8,1]{1,0:T(8,128)}', space=vmem, size = 0x1000, scoped, tag = 'scratch operand']
  #allocation5 [shape = 'f32[8,1]{1,0:T(8,128)}', space=vmem, size = 0x1000, scoped, tag = 'scratch operand']
  #allocation6 [shape = 'f32[8,1]{1,0:T(8,128)}', space=vmem, size = 0x1000, scoped, tag = 'scratch operand']
  %s0 = inlined_call_operand.hbm [shape: bf16[8,128], index: 0, kind: input, shape index: {}]
  %s1 = inlined_call_operand.hbm [shape: bf16[128,128], index: 1, kind: input, shape index: {}]
  %s2 = inlined_call_operand.vmem [shape: f32[1,128], index: 2, kind: input, shape index: {}]
  %s3 = inlined_call_operand.hbm [shape: bf16[256,128], index: 3, kind: input, shape index: {}]
  %s4 = inlined_call_operand.vmem [shape: f32[1,128], index: 4, kind: input, shape index: {}]
  %s5 = inlined_call_operand.hbm [shape: f32[8,128], index: 5, kind: output, shape index: {}]
  %s6 = sld [smem:[#allocation0]]
  $region81: #{tpu_custom_call.1} parent=0
    _
  %s8 = ssub.s32 1, %s6
  %s9 = scalar_select 0, %s8, %s6
  $region1: #{tpu_custom_call.1} parent=0
    #allocation7 [shape = 'u8[2048]{0}', space=vmem, size = 0x800, scoped, tag = 'input window, operand 0, single buffered']
    #allocation8 [shape = 's32[2]{0}', space=sflag, size = 0x8, scoped, tag = 'scoped memory for tpu_custom_call.1']
    #allocation9 [shape = 's32[2]{0}', space=sflag, size = 0x8, scoped, tag = 'scoped memory for tpu_custom_call.1']
    #allocation10 [shape = 'u8[32768]{0}', space=vmem, size = 0x8000, scoped, tag = 'input window, operand 1, single buffered']
    #allocation11 [shape = 's32[1]{0}', space=sflag, size = 0x4, scoped, tag = 'scoped memory for tpu_custom_call.1']
    #allocation12 [shape = 'u8[131072]{0}', space=vmem, size = 0x20000, scoped, tag = 'input window, operand 3']
    #allocation13 [shape = 'u8[8192]{0}', space=vmem, size = 0x2000, scoped, tag = 'output window, operand 0']
    %10 = vsyncpa [#allocation8], 0
    %11 = vsyncpa [#allocation11], 0
    %12 = vsyncpa [#allocation9], 0
    %s13 = scalar_lea.sflag [#allocation9], 1
    %14 = vsyncpa %s13, 0
    loop: start=0, step=1, limit=4
    $region2: #{tpu_custom_call.1} parent=1 // loop_pre_header
      _
    $region3: #{tpu_custom_call.1} parent=1 // loop_header
      %s16 = sphi 0, %s20
      %p17 = scmp.ge.s32.totalorder %s16, 4
      %s23 = sphi 0, %s35
      %s24 = sphi 0, %s31
      %s25 = sphi 0, %s23
      %s26 = sphi 0, %s24
      %s27 = sphi 0, %s25
      %s28 = sphi 0, %s26
      %s36 = sphi 0, %s36
      %s38 = sphi 0, %s36
      %s39 = sphi 0, %s38
      %s53 = sphi 0, %s39
      %s57 = sphi 0, %s57
      %s59 = sphi 0, %s57
      %s60 = sphi 0, %s59
      %s74 = sphi 0, %s60
      %s78 = sphi 0, %s78
      %s80 = sphi 0, %s78
      %s81 = sphi 0, %s80
      %s95 = sphi 0, %s81
      %s105 = sphi 0, %s107
      %s108 = sphi 0, %s105
      %s109 = sphi 0, %s108
      %s125 = sphi 0, %s109
      %s135 = sphi 0, %s137
      %s138 = sphi 0, %s135
      %s139 = sphi 0, %s138
      %s155 = sphi 0, %s139
      %s163 = sphi 0, %s165
      %s166 = sphi 0, %s163
      %s167 = sphi 0, %s166
      %s183 = sphi 0, %s167
    $region4: #{tpu_custom_call.1} parent=1 // loop_header_branch
      %19 = sbr.rel (%p17) target = $region8
    $region5: #{tpu_custom_call.1} parent=1 // loop_body
      %s21 = ssub.s32 %s16, 1
      %s22 = ssub.s32 %s16, 2
      %s29 = sadd.s32 1, %s24
      %p30 = scmp.ge.s32.totalorder %s29, 1
      %s31 = scalar_select %p30, 0, %s29
      %s32 = sadd.s32 1, %s23
      %s33 = scalar_select %p30, %s32, %s23
      %p34 = scmp.ge.s32.totalorder %s33, 2
      %s35 = scalar_select %p34, 0, %s33
      %s37 = sadd.s32 %s36, 1
      %p40 = scmp.eq.s32.totalorder %s16, 1
      %p41 = scmp.ne.s32.totalorder %s36, %s38
      %p42 = scmp.eq.s32.totalorder %s16, 0
      %p43 = por %p41, %p42
      %p44 = scmp.ne.s32.totalorder %s36, %s38
      %p45 = scmp.eq.s32.totalorder %s21, 1
      %p46 = por %p44, %p45
      %p47 = scmp.ne.s32.totalorder %s38, %s39
      %p48 = scmp.eq.s32.totalorder %s21, 0
      %p49 = por %p47, %p48
      %p50 = scmp.ne.s32.totalorder %s38, %s39
      %p51 = scmp.eq.s32.totalorder %s22, 1
      %p52 = por %p50, %p51
      %p54 = scmp.ne.s32.totalorder %s39, %s53
      %p55 = scmp.eq.s32.totalorder %s22, 0
      %p56 = por %p54, %p55
      %s58 = sadd.s32 %s57, 1
      %p61 = scmp.eq.s32.totalorder %s16, 1
      %p62 = scmp.ne.s32.totalorder %s57, %s59
      %p63 = scmp.eq.s32.totalorder %s16, 0
      %p64 = por %p62, %p63
      %p65 = scmp.ne.s32.totalorder %s57, %s59
      %p66 = scmp.eq.s32.totalorder %s21, 1
      %p67 = por %p65, %p66
      %p68 = scmp.ne.s32.totalorder %s59, %s60
      %p69 = scmp.eq.s32.totalorder %s21, 0
      %p70 = por %p68, %p69
      %p71 = scmp.ne.s32.totalorder %s59, %s60
      %p72 = scmp.eq.s32.totalorder %s22, 1
      %p73 = por %p71, %p72
      %p75 = scmp.ne.s32.totalorder %s60, %s74
      %p76 = scmp.eq.s32.totalorder %s22, 0
      %p77 = por %p75, %p76
      %s79 = sadd.s32 %s78, 1
      %p82 = scmp.eq.s32.totalorder %s16, 1
      %p83 = scmp.ne.s32.totalorder %s78, %s80
      %p84 = scmp.eq.s32.totalorder %s16, 0
      %p85 = por %p83, %p84
      %p86 = scmp.ne.s32.totalorder %s78, %s80
      %p87 = scmp.eq.s32.totalorder %s21, 1
      %p88 = por %p86, %p87
      %p89 = scmp.ne.s32.totalorder %s80, %s81
      %p90 = scmp.eq.s32.totalorder %s21, 0
      %p91 = por %p89, %p90
      %p92 = scmp.ne.s32.totalorder %s80, %s81
      %p93 = scmp.eq.s32.totalorder %s22, 1
      %p94 = por %p92, %p93
      %p96 = scmp.ne.s32.totalorder %s81, %s95
      %p97 = scmp.eq.s32.totalorder %s22, 0
      %p98 = por %p96, %p97
      %s99 = ssub.s32 1, %s23
      %s100 = smul.u32 %s24, %s99
      %s101 = ssub.s32 1, %s35
      %s102 = smul.u32 %s31, %s101
      %s103 = ssub.s32 %s100, %s102
      %p104 = scmp.eq.s32.totalorder %s103, 0
      %s106 = sadd.s32 %s105, 1
      %s107 = scalar_select %p104, %s105, %s106
      %p110 = pneg %p104
      %p111 = scmp.eq.s32.totalorder %s16, 1
      %p112 = por %p110, %p111
      %p113 = scmp.ne.s32.totalorder %s105, %s108
      %p114 = scmp.eq.s32.totalorder %s16, 0
      %p115 = por %p113, %p114
      %p116 = scmp.ne.s32.totalorder %s105, %s108
      %p117 = scmp.eq.s32.totalorder %s21, 1
      %p118 = por %p116, %p117
      %p119 = scmp.ne.s32.totalorder %s108, %s109
      %p120 = scmp.eq.s32.totalorder %s21, 0
      %p121 = por %p119, %p120
      %p122 = scmp.ne.s32.totalorder %s108, %s109
      %p123 = scmp.eq.s32.totalorder %s22, 1
      %p124 = por %p122, %p123
      %p126 = scmp.ne.s32.totalorder %s109, %s125
      %p127 = scmp.eq.s32.totalorder %s22, 0
      %p128 = por %p126, %p127
      %s129 = ssub.s32 1, %s23
      %s130 = smul.u32 %s24, %s129
      %s131 = ssub.s32 1, %s35
      %s132 = smul.u32 %s31, %s131
      %s133 = ssub.s32 %s130, %s132
      %p134 = scmp.eq.s32.totalorder %s133, 0
      %s136 = sadd.s32 %s135, 1
      %s137 = scalar_select %p134, %s135, %s136
      %p140 = pneg %p134
      %p141 = scmp.eq.s32.totalorder %s16, 1
      %p142 = por %p140, %p141
      %p143 = scmp.ne.s32.totalorder %s135, %s138
      %p144 = scmp.eq.s32.totalorder %s16, 0
      %p145 = por %p143, %p144
      %p146 = scmp.ne.s32.totalorder %s135, %s138
      %p147 = scmp.eq.s32.totalorder %s21, 1
      %p148 = por %p146, %p147
      %p149 = scmp.ne.s32.totalorder %s138, %s139
      %p150 = scmp.eq.s32.totalorder %s21, 0
      %p151 = por %p149, %p150
      %p152 = scmp.ne.s32.totalorder %s138, %s139
      %p153 = scmp.eq.s32.totalorder %s22, 1
      %p154 = por %p152, %p153
      %p156 = scmp.ne.s32.totalorder %s139, %s155
      %p157 = scmp.eq.s32.totalorder %s22, 0
      %p158 = por %p156, %p157
      %s159 = smul.u32 %s24, %s23
      %s160 = smul.u32 %s31, %s35
      %s161 = ssub.s32 %s159, %s160
      %p162 = scmp.eq.s32.totalorder %s161, 0
      %s164 = sadd.s32 %s163, 1
      %s165 = scalar_select %p162, %s163, %s164
      %p168 = pneg %p162
      %p169 = scmp.eq.s32.totalorder %s16, 1
      %p170 = por %p168, %p169
      %p171 = scmp.ne.s32.totalorder %s163, %s166
      %p172 = scmp.eq.s32.totalorder %s16, 0
      %p173 = por %p171, %p172
      %p174 = scmp.ne.s32.totalorder %s163, %s166
      %p175 = scmp.eq.s32.totalorder %s21, 1
      %p176 = por %p174, %p175
      %p177 = scmp.ne.s32.totalorder %s166, %s167
      %p178 = scmp.eq.s32.totalorder %s21, 0
      %p179 = por %p177, %p178
      %p180 = scmp.ne.s32.totalorder %s166, %s167
      %p181 = scmp.eq.s32.totalorder %s22, 1
      %p182 = por %p180, %p181
      %p184 = scmp.ne.s32.totalorder %s167, %s183
      %p185 = scmp.eq.s32.totalorder %s22, 0
      %p186 = por %p184, %p185
      %p187 = scmp.le.s32.totalorder 1, %s16
      %p188 = scmp.lt.s32.totalorder %s16, 3
      %p189 = pnand %p187, %p188
      %p190 = pneg %p189
      // Predicated region
      $region9: #{tpu_custom_call.1} parent=5 // pred_check
        _
      $region10: #{tpu_custom_call.1} parent=5 // pred_check_branch
        %192 = sbr.rel (%p189) target = $region12
      $region11: #{tpu_custom_call.1} parent=5 // pred_region
        %s193 = ssub.s32 %s16, 1
        // Predicated region
        $region13: #{tpu_custom_call.1} parent=11 // pred_check
          %p194 = pneg %p49
        $region14: #{tpu_custom_call.1} parent=11 // pred_check_branch
          %196 = sbr.rel (%p194) target = $region16
        $region15: #{tpu_custom_call.1} parent=11 // pred_region
          %s198 = ssub.s32 64, 64
          %199 = vsyncadd [#allocation8], %s198
          %s201 = sshll.u32 [#allocation7], 4
          %s202 = int_to_ptr.vmem [resolvable:$true] %s201
          %204 = dma.hbm_to_vmem [thread:$0]  %s0, 64, %s202, [#allocation8]
        $region16: #{tpu_custom_call.1} parent=11 // pred_fallthru
          _
        // Predicated region
        $region17: #{tpu_custom_call.1} parent=11 // pred_check
          %p205 = pneg %p70
        $region18: #{tpu_custom_call.1} parent=11 // pred_check_branch
          %207 = sbr.rel (%p205) target = $region20
        $region19: #{tpu_custom_call.1} parent=11 // pred_region
          %s209 = ssub.s32 1024, 1024
          %210 = vsyncadd [#allocation11], %s209
          %s211 = sshll.u32 [#allocation10], 4
          %s212 = int_to_ptr.vmem [resolvable:$true] %s211
          %217 = dma.hbm_to_vmem [thread:$0]  %s1, 1024, %s212, [#allocation11], 64, 64, 4
        $region20: #{tpu_custom_call.1} parent=11 // pred_fallthru
          _
        // Predicated region
        $region21: #{tpu_custom_call.1} parent=11 // pred_check
          %p218 = pneg %p91
        $region22: #{tpu_custom_call.1} parent=11 // pred_check_branch
          %220 = sbr.rel (%p218) target = $region24
        $region23: #{tpu_custom_call.1} parent=11 // pred_region
          _
        $region24: #{tpu_custom_call.1} parent=11 // pred_fallthru
          _
      $region12: #{tpu_custom_call.1} parent=5 // pred_fallthru
        _
      %p221 = scmp.lt.s32.totalorder %s16, 2
      // Predicated region
      $region25: #{tpu_custom_call.1} parent=5 // pred_check
        %p222 = pneg %p221
      $region26: #{tpu_custom_call.1} parent=5 // pred_check_branch
        %224 = sbr.rel (%p222) target = $region28
      $region27: #{tpu_custom_call.1} parent=5 // pred_region
        // Predicated region
        $region29: #{tpu_custom_call.1} parent=27 // pred_check
          %p225 = pneg %p115
        $region30: #{tpu_custom_call.1} parent=27 // pred_check_branch
          %227 = sbr.rel (%p225) target = $region32
        $region31: #{tpu_custom_call.1} parent=27 // pred_region
          %s228 = sand.u32 %s16, 1
          %s229 = scalar_lea.sflag [#allocation8], %s228
          %s230 = sand.u32 %s105, 1
          %s231 = smul.addr %s230, 128
          %s232 = scalar_lea.vmem [#allocation12], %s231
          %s233 = ssub.s32 1, %s23
          %s234 = smul.u32 %s24, %s233
          %s236 = ssub.s32 2048, 2048
          %237 = vsyncadd %s229, %s236
          %s238 = smul.addr %s234, 64
          %s239 = scalar_lea.hbm %s3, %s238
          %s240 = sshll.u32 %s232, 4
          %s241 = int_to_ptr.vmem [resolvable:$true] %s240
          %246 = dma.hbm_to_vmem [thread:$0]  %s239, 2048, %s241, %s229, 64, 64, 4
        $region32: #{tpu_custom_call.1} parent=27 // pred_fallthru
          _
        // Predicated region
        $region33: #{tpu_custom_call.1} parent=27 // pred_check
          %p247 = pneg %p145
        $region34: #{tpu_custom_call.1} parent=27 // pred_check_branch
          %249 = sbr.rel (%p247) target = $region36
        $region35: #{tpu_custom_call.1} parent=27 // pred_region
          %s250 = ssub.s32 1, %s23
          %s251 = smul.u32 %s24, %s250
          %p252 = scmp.lt.s32.totalorder %s251, 0
          %s253 = scalar_select %p252, %s251, 0
          %s254 = scalar_lea.vmem %s4, %s253
          %s255 = ssub.s32 1, %s23
          %s256 = smul.u32 %s24, %s255
        $region36: #{tpu_custom_call.1} parent=27 // pred_fallthru
          _
      $region28: #{tpu_custom_call.1} parent=5 // pred_fallthru
        _
      %p257 = scmp.le.s32.totalorder 1, %s16
      %p258 = scmp.lt.s32.totalorder %s16, 3
      %p259 = pnand %p257, %p258
      %p260 = pneg %p259
      // Predicated region
      $region37: #{tpu_custom_call.1} parent=5 // pred_check
        _
      $region38: #{tpu_custom_call.1} parent=5 // pred_check_branch
        %262 = sbr.rel (%p259) target = $region40
      $region39: #{tpu_custom_call.1} parent=5 // pred_region
        %s263 = ssub.s32 %s16, 1
        // Predicated region
        $region41: #{tpu_custom_call.1} parent=39 // pred_check
          %p264 = pneg %p49
        $region42: #{tpu_custom_call.1} parent=39 // pred_check_branch
          %266 = sbr.rel (%p264) target = $region44
        $region43: #{tpu_custom_call.1} parent=39 // pred_region
          %267 = dma.done [#allocation8], 64
        $region44: #{tpu_custom_call.1} parent=39 // pred_fallthru
          _
        // Predicated region
        $region45: #{tpu_custom_call.1} parent=39 // pred_check
          %p268 = pneg %p70
        $region46: #{tpu_custom_call.1} parent=39 // pred_check_branch
          %270 = sbr.rel (%p268) target = $region48
        $region47: #{tpu_custom_call.1} parent=39 // pred_region
          %271 = dma.done [#allocation11], 1024
        $region48: #{tpu_custom_call.1} parent=39 // pred_fallthru
          _
        %s272 = sand.u32 %s21, 1
        %s273 = scalar_lea.sflag [#allocation8], %s272
        %s274 = sand.u32 %s108, 1
        %s275 = smul.addr %s274, 128
        %s276 = scalar_lea.vmem [#allocation12], %s275
        // Predicated region
        $region49: #{tpu_custom_call.1} parent=39 // pred_check
          %p277 = pneg %p121
        $region50: #{tpu_custom_call.1} parent=39 // pred_check_branch
          %279 = sbr.rel (%p277) target = $region52
        $region51: #{tpu_custom_call.1} parent=39 // pred_region
          %280 = dma.done %s273, 2048
        $region52: #{tpu_custom_call.1} parent=39 // pred_fallthru
          _
        %p281 = pneg %p49
        %p282 = pneg %p46
        %p283 = pneg %p70
        %p284 = pneg %p67
        %p285 = pneg %p91
        %p286 = pneg %p88
        %s287 = sand.u32 %s21, 1
        %s288 = scalar_lea.sflag [#allocation8], %s287
        %s289 = sand.u32 %s108, 1
        %s290 = smul.addr %s289, 128
        %s291 = scalar_lea.vmem [#allocation12], %s290
        %p292 = pneg %p121
        %p293 = pneg %p118
        %s294 = ssub.s32 1, %s25
        %s295 = smul.u32 %s26, %s294
        %p296 = scmp.lt.s32.totalorder %s295, 0
        %s297 = scalar_select %p296, %s295, 0
        %s298 = scalar_lea.vmem %s4, %s297
        %p299 = pneg %p151
        %p300 = pneg %p148
        %p301 = pneg %p179
        %p302 = pneg %p176
        %s303 = sand.u32 %s166, 1
        %s304 = scalar_lea.sflag [#allocation9], %s303
        %s305 = sand.u32 %s166, 1
        %s306 = smul.addr %s305, 8
        %s307 = scalar_lea.vmem [#allocation13], %s306
        %s308 = ssub.s32 1, %s25
        %s309 = smul.u32 %s26, %s308
        %s310 = ssub.s32 1, %s25
        %s311 = smul.u32 %s26, %s310
        %p312 = scmp.lt.s32.totalorder %s311, 0
        %s313 = scalar_select %p312, %s311, 0
        %s314 = scalar_lea.vmem %s4, %s313
        %s315 = ssub.s32 1, %s25
        %s316 = smul.u32 %s26, %s315
        %s317 = smul.u32 %s26, %s25
        %p319 = scmp.eq.s32.totalorder %s25, 0
        %p320 = scmp.eq.s32.totalorder %s26, 0
        %p321 = pnand %p319, %p320
        %p322 = pneg %p321
        // Predicated region
        $region53: #{tpu_custom_call.1} parent=39 // pred_check
          _
        $region54: #{tpu_custom_call.1} parent=39 // pred_check_branch
          %324 = sbr.rel (%p321) target = $region56
        $region55: #{tpu_custom_call.1} parent=39 // pred_region
          %v325 = vld [vmem:[#allocation7] sm:$0xf]
          %v326 = vld [vmem:[#allocation10] sm:$0xf]
          %v327 = vld [vmem:[#allocation10 + $0x4] sm:$0xf]
          %v328 = vld [vmem:[#allocation10 + $0x8] sm:$0xf]
          %v329 = vld [vmem:[#allocation10 + $0xc] sm:$0xf]
          %v330 = vld [vmem:[#allocation10 + $0x10] sm:$0xf]
          %v331 = vld [vmem:[#allocation10 + $0x14] sm:$0xf]
          %v332 = vld [vmem:[#allocation10 + $0x18] sm:$0xf]
          %v333 = vld [vmem:[#allocation10 + $0x1c] sm:$0xf]
          %v334 = vld [vmem:[#allocation10 + $0x20] sm:$0xf]
          %v335 = vld [vmem:[#allocation10 + $0x24] sm:$0xf]
          %v336 = vld [vmem:[#allocation10 + $0x28] sm:$0xf]
          %v337 = vld [vmem:[#allocation10 + $0x2c] sm:$0xf]
          %v338 = vld [vmem:[#allocation10 + $0x30] sm:$0xf]
          %v339 = vld [vmem:[#allocation10 + $0x34] sm:$0xf]
          %v340 = vld [vmem:[#allocation10 + $0x38] sm:$0xf]
          %v341 = vld [vmem:[#allocation10 + $0x3c] sm:$0xf]
          %v342 = vld [vmem:[%s2] sm:$0x1]
          %v344 = vlaneseq
          %v345 = vshrl.u32 %v344, 7
          %v346 = vsub.s32 0, %v345
          %v347 = vrot.slane %v342, %v346
          %v365 = vunpack.c.l.b16 %v326
          %v366 = vunpack.c.l.b16 %v327
          %v367 = vunpack.c.l.b16 %v328
          %v368 = vunpack.c.l.b16 %v329
          %v369 = vunpack.c.l.b16 %v330
          %v370 = vunpack.c.l.b16 %v331
          %v371 = vunpack.c.l.b16 %v332
          %v372 = vunpack.c.l.b16 %v333
          %v373 = vunpack.c.l.b16 %v334
          %v374 = vunpack.c.l.b16 %v335
          %v375 = vunpack.c.l.b16 %v336
          %v376 = vunpack.c.l.b16 %v337
          %v377 = vunpack.c.l.b16 %v338
          %v378 = vunpack.c.l.b16 %v339
          %v379 = vunpack.c.l.b16 %v340
          %v380 = vunpack.c.l.b16 %v341
          %v381 = vpack.c.b16 %v366, %v365
          %v382 = vpack.c.b16 %v368, %v367
          %v383 = vpack.c.b16 %v370, %v369
          %v384 = vpack.c.b16 %v372, %v371
          %v385 = vpack.c.b16 %v374, %v373
          %v386 = vpack.c.b16 %v376, %v375
          %v387 = vpack.c.b16 %v378, %v377
          %v388 = vpack.c.b16 %v380, %v379
          %397 = vmatprep.subr.bf16.mxu0 0
          %398 = vmatpush1.bf16.msra.mxu0 %v388
          %399 = vmatprep.subr.bf16.mxu0 0
          %400 = vmatpush1.bf16.msra.mxu0 %v387
          %401 = vmatprep.subr.bf16.mxu0 0
          %402 = vmatpush1.bf16.msra.mxu0 %v386
          %403 = vmatprep.subr.bf16.mxu0 0
          %404 = vmatpush1.bf16.msra.mxu0 %v385
          %405 = vmatprep.subr.bf16.mxu0 0
          %406 = vmatpush1.bf16.msra.mxu0 %v384
          %407 = vmatprep.subr.bf16.mxu0 0
          %408 = vmatpush1.bf16.msra.mxu0 %v383
          %409 = vmatprep.subr.bf16.mxu0 0
          %410 = vmatpush1.bf16.msra.mxu0 %v382
          %411 = vmatprep.subr.bf16.mxu0 0
          %412 = vmatpush1.bf16.msra.mxu0 %v381
          %413 = vmatprep.subr.bf16.mxu0 0
          %414 = vmatpush2.bf16.msra.mxu0 0
          %415 = vmatprep.subr.bf16.mxu0 0
          %416 = vmatpush2.bf16.msra.mxu0 0
          %417 = vmatprep.subr.bf16.mxu0 0
          %418 = vmatpush2.bf16.msra.mxu0 0
          %419 = vmatprep.subr.bf16.mxu0 0
          %420 = vmatpush2.bf16.msra.mxu0 0
          %421 = vmatprep.subr.bf16.mxu0 0
          %422 = vmatpush2.bf16.msra.mxu0 0
          %423 = vmatprep.subr.bf16.mxu0 0
          %424 = vmatpush2.bf16.msra.mxu0 0
          %425 = vmatprep.subr.bf16.mxu0 0
          %426 = vmatpush2.bf16.msra.mxu0 0
          %427 = vmatprep.subr.bf16.mxu0 0
          %428 = vmatpush2.bf16.msra.mxu0 0
          %429 = vmatprep.mubr.bf16.mxu0 0
          %430 = vmatmul.mubr.bf16.gmra.mxu0 %v325
          %v431 = vpop.f32.mrf.mxu0
          %v432 = vadd.f32 %v347, %v431
          %v433 = vpop.f32.mrf.mxu0
          %v434 = vpop.f32.mrf.mxu0
          %v435 = vpop.f32.mrf.mxu0
          %436 = vdwg.mxu0
          %v437 = vtanh.pop %v432
          %438 = vst [vmem:[#allocation2] sm:$0xf] %v325
          %v439 = vpack.c.bf16 %v437, %v437
          %440 = vst [vmem:[#allocation2 + $0x4] sm:$0xf] %v439
          %vm441 = vcmask 7168
          %442 = vst.msk [vmem:[#allocation4] sm:$0xff] %vm441, -inf
          %443 = vst.msk [vmem:[#allocation5] sm:$0xff] %vm441, 0.0
        $region56: #{tpu_custom_call.1} parent=39 // pred_fallthru
          _
        // Predicated region
        $region57: #{tpu_custom_call.1} parent=39 // pred_check
          %p444 = pneg %p319
        $region58: #{tpu_custom_call.1} parent=39 // pred_check_branch
          %446 = sbr.rel (%p444) target = $region60
        $region59: #{tpu_custom_call.1} parent=39 // pred_region
          %v447 = vld [vmem:[#allocation2] sm:$0xff]
          %v448 = vld [vmem:[%s276] sm:$0xf]
          %v449 = vld [vmem:[%s276 + $0x4] sm:$0xf]
          %v450 = vld [vmem:[%s276 + $0x8] sm:$0xf]
          %v451 = vld [vmem:[%s276 + $0xc] sm:$0xf]
          %v452 = vld [vmem:[%s276 + $0x10] sm:$0xf]
          %v453 = vld [vmem:[%s276 + $0x14] sm:$0xf]
          %v454 = vld [vmem:[%s276 + $0x18] sm:$0xf]
          %v455 = vld [vmem:[%s276 + $0x1c] sm:$0xf]
          %v456 = vld [vmem:[%s276 + $0x20] sm:$0xf]
          %v457 = vld [vmem:[%s276 + $0x24] sm:$0xf]
          %v458 = vld [vmem:[%s276 + $0x28] sm:$0xf]
          %v459 = vld [vmem:[%s276 + $0x2c] sm:$0xf]
          %v460 = vld [vmem:[%s276 + $0x30] sm:$0xf]
          %v461 = vld [vmem:[%s276 + $0x34] sm:$0xf]
          %v462 = vld [vmem:[%s276 + $0x38] sm:$0xf]
          %v463 = vld [vmem:[%s276 + $0x3c] sm:$0xf]
          %v464 = vld [vmem:[%s276 + $0x40] sm:$0xf]
          %v465 = vld [vmem:[%s276 + $0x44] sm:$0xf]
          %v466 = vld [vmem:[%s276 + $0x48] sm:$0xf]
          %v467 = vld [vmem:[%s276 + $0x4c] sm:$0xf]
          %v468 = vld [vmem:[%s276 + $0x50] sm:$0xf]
          %v469 = vld [vmem:[%s276 + $0x54] sm:$0xf]
          %v470 = vld [vmem:[%s276 + $0x58] sm:$0xf]
          %v471 = vld [vmem:[%s276 + $0x5c] sm:$0xf]
          %v472 = vld [vmem:[%s276 + $0x60] sm:$0xf]
          %v473 = vld [vmem:[%s276 + $0x64] sm:$0xf]
          %v474 = vld [vmem:[%s276 + $0x68] sm:$0xf]
          %v475 = vld [vmem:[%s276 + $0x6c] sm:$0xf]
          %v476 = vld [vmem:[%s276 + $0x70] sm:$0xf]
          %v477 = vld [vmem:[%s276 + $0x74] sm:$0xf]
          %v478 = vld [vmem:[%s276 + $0x78] sm:$0xf]
          %v479 = vld [vmem:[%s276 + $0x7c] sm:$0xf]
          %v480 = vld [vmem:[%s314] sm:$0x1]
          %v482 = vlaneseq
          %v483 = vshrl.u32 %v482, 7
          %v484 = vsub.s32 0, %v483
          %v485 = vrot.slane %v480, %v484
          %v488 = vunpack.c.l.b16 %v447
          %v489 = vunpack.c.h.b16 %v447
          %v490 = vpack.c.b16 %v488, %v488
          %v491 = vpack.c.b16 %v489, %v489
          %v526 = vunpack.c.l.b16 %v448
          %v527 = vunpack.c.l.b16 %v449
          %v528 = vunpack.c.l.b16 %v450
          %v529 = vunpack.c.l.b16 %v451
          %v530 = vunpack.c.l.b16 %v452
          %v531 = vunpack.c.l.b16 %v453
          %v532 = vunpack.c.l.b16 %v454
          %v533 = vunpack.c.l.b16 %v455
          %v534 = vunpack.c.l.b16 %v456
          %v535 = vunpack.c.l.b16 %v457
          %v536 = vunpack.c.l.b16 %v458
          %v537 = vunpack.c.l.b16 %v459
          %v538 = vunpack.c.l.b16 %v460
          %v539 = vunpack.c.l.b16 %v461
          %v540 = vunpack.c.l.b16 %v462
          %v541 = vunpack.c.l.b16 %v463
          %v542 = vunpack.c.l.b16 %v464
          %v543 = vunpack.c.l.b16 %v465
          %v544 = vunpack.c.l.b16 %v466
          %v545 = vunpack.c.l.b16 %v467
          %v546 = vunpack.c.l.b16 %v468
          %v547 = vunpack.c.l.b16 %v469
          %v548 = vunpack.c.l.b16 %v470
          %v549 = vunpack.c.l.b16 %v471
          %v550 = vunpack.c.l.b16 %v472
          %v551 = vunpack.c.l.b16 %v473
          %v552 = vunpack.c.l.b16 %v474
          %v553 = vunpack.c.l.b16 %v475
          %v554 = vunpack.c.l.b16 %v476
          %v555 = vunpack.c.l.b16 %v477
          %v556 = vunpack.c.l.b16 %v478
          %v557 = vunpack.c.l.b16 %v479
          %v558 = vpack.c.b16 %v527, %v526
          %v559 = vpack.c.b16 %v529, %v528
          %v560 = vpack.c.b16 %v531, %v530
          %v561 = vpack.c.b16 %v533, %v532
          %v562 = vpack.c.b16 %v535, %v534
          %v563 = vpack.c.b16 %v537, %v536
          %v564 = vpack.c.b16 %v539, %v538
          %v565 = vpack.c.b16 %v541, %v540
          %v566 = vpack.c.b16 %v543, %v542
          %v567 = vpack.c.b16 %v545, %v544
          %v568 = vpack.c.b16 %v547, %v546
          %v569 = vpack.c.b16 %v549, %v548
          %v570 = vpack.c.b16 %v551, %v550
          %v571 = vpack.c.b16 %v553, %v552
          %v572 = vpack.c.b16 %v555, %v554
          %v573 = vpack.c.b16 %v557, %v556
          %590 = vmatprep.subr.bf16.mxu0 0
          %591 = vmatpush1.bf16.msra.mxu0 %v565
          %592 = vmatprep.subr.bf16.mxu0 0
          %593 = vmatpush1.bf16.msra.mxu0 %v564
          %594 = vmatprep.subr.bf16.mxu0 0
          %595 = vmatpush1.bf16.msra.mxu0 %v563
          %596 = vmatprep.subr.bf16.mxu0 0
          %597 = vmatpush1.bf16.msra.mxu0 %v562
          %598 = vmatprep.subr.bf16.mxu0 0
          %599 = vmatpush1.bf16.msra.mxu0 %v561
          %600 = vmatprep.subr.bf16.mxu0 0
          %601 = vmatpush1.bf16.msra.mxu0 %v560
          %602 = vmatprep.subr.bf16.mxu0 0
          %603 = vmatpush1.bf16.msra.mxu0 %v559
          %604 = vmatprep.subr.bf16.mxu0 0
          %605 = vmatpush1.bf16.msra.mxu0 %v558
          %606 = vmatprep.subr.bf16.mxu0 0
          %607 = vmatpush2.bf16.msra.mxu0 %v573
          %608 = vmatprep.subr.bf16.mxu0 0
          %609 = vmatpush2.bf16.msra.mxu0 %v572
          %610 = vmatprep.subr.bf16.mxu0 0
          %611 = vmatpush2.bf16.msra.mxu0 %v571
          %612 = vmatprep.subr.bf16.mxu0 0
          %613 = vmatpush2.bf16.msra.mxu0 %v570
          %614 = vmatprep.subr.bf16.mxu0 0
          %615 = vmatpush2.bf16.msra.mxu0 %v569
          %616 = vmatprep.subr.bf16.mxu0 0
          %617 = vmatpush2.bf16.msra.mxu0 %v568
          %618 = vmatprep.subr.bf16.mxu0 0
          %619 = vmatpush2.bf16.msra.mxu0 %v567
          %620 = vmatprep.subr.bf16.mxu0 0
          %621 = vmatpush2.bf16.msra.mxu0 %v566
          %622 = vmatprep.mubr.bf16.mxu0 %v491
          %623 = vmatmul.mubr.bf16.gmra.mxu0 %v490
          %v624 = vpop.f32.mrf.mxu0
          %v625 = vadd.f32 %v485, %v624
          %v626 = vpop.f32.mrf.mxu0
          %v627 = vpop.f32.mrf.mxu0
          %v628 = vpop.f32.mrf.mxu0
          %629 = vdwg.mxu0
          %s630 = smul.u32 %s26, 8
          %s631 = scalar_lea.vmem [#allocation3], %s630
          %632 = vst [vmem:[%s631] sm:$0xff] %v625
          %633 = vmax.xlane.f32.xlu0 %v625
          %v634 = vpop.xlane.xlu0 %633
          %v635 = vld [vmem:[#allocation4] sm:$0xff]
          %v636 = vmax.f32 %v635, %v634
          %v637 = vld [vmem:[#allocation5] sm:$0xff]
          %v638 = vsub.f32 %v635, %v636
          %v639 = vmul.f32 %v638, 1.442695
          %v640 = vpow.pop %v639
          %v641 = vmul.f32 %v637, %v640
          %643 = vset.pattern.permute.xlu0 0
          %644 = vperm.xlu0 %643, %v636
          %v645 = vpop.permute.xlu0 %644
          %v647 = vsub.f32 %v625, %v645
          %v648 = vmul.f32 %v647, 1.442695
          %v649 = vpow.pop %v648
          %650 = vadd.xlane.f32.xlu0 %v649
          %v651 = vpop.xlane.xlu0 %650
          %v652 = vadd.f32 %v641, %v651
          %vm653 = vcmask 7168
          %654 = vst.msk [vmem:[#allocation5] sm:$0xff] %vm653, %v652
          %655 = vst.msk [vmem:[#allocation4] sm:$0xff] %vm653, %v636
          // Predicated region
          $region61: #{tpu_custom_call.1} parent=59 // pred_check
            %p656 = pneg %p320
          $region62: #{tpu_custom_call.1} parent=59 // pred_check_branch
            %658 = sbr.rel (%p656) target = $region64
          $region63: #{tpu_custom_call.1} parent=59 // pred_region
            %v659 = vld [vmem:[#allocation4] sm:$0xff]
            %v660 = vld [vmem:[#allocation5] sm:$0xff]
            %v661 = vlog2.pop %v660
            %v662 = vmul.f32 %v661, 0.6931472
            %v663 = vadd.f32 %v659, %v662
            %664 = vst.msk [vmem:[#allocation6] sm:$0xff] %vm653, %v663
          $region64: #{tpu_custom_call.1} parent=59 // pred_fallthru
            _
        $region60: #{tpu_custom_call.1} parent=39 // pred_fallthru
          _
        %p665 = scmp.eq.s32.totalorder %s25, 1
        // Predicated region
        $region65: #{tpu_custom_call.1} parent=39 // pred_check
          %p666 = pneg %p665
        $region66: #{tpu_custom_call.1} parent=39 // pred_check_branch
          %668 = sbr.rel (%p666) target = $region68
        $region67: #{tpu_custom_call.1} parent=39 // pred_region
          %s669 = smul.u32 %s26, 8
          %s670 = scalar_lea.vmem [#allocation3], %s669
          %v671 = vld [vmem:[%s670] sm:$0xff]
          %v672 = vld [vmem:[#allocation6] sm:$0xff]
          %674 = vset.pattern.permute.xlu0 0
          %675 = vperm.xlu0 %674, %v672
          %v676 = vpop.permute.xlu0 %675
          %v678 = vsub.f32 %v671, %v676
          %679 = vst [vmem:[%s307] sm:$0xff] %v678
        $region68: #{tpu_custom_call.1} parent=39 // pred_fallthru
          _
        %s680 = sand.u32 %s166, 1
        %s681 = scalar_lea.sflag [#allocation9], %s680
        %s682 = sand.u32 %s166, 1
        %s683 = smul.addr %s682, 8
        %s684 = scalar_lea.vmem [#allocation13], %s683
        // Predicated region
        $region69: #{tpu_custom_call.1} parent=39 // pred_check
          %p685 = pneg %p176
        $region70: #{tpu_custom_call.1} parent=39 // pred_check_branch
          %687 = sbr.rel (%p685) target = $region72
        $region71: #{tpu_custom_call.1} parent=39 // pred_region
          %s688 = smul.u32 %s26, %s25
          %s690 = ssub.s32 128, 128
          %691 = vsyncadd %s681, %s690
          %s692 = smul.addr %s688, 128
          %s693 = scalar_lea.hbm %s5, %s692
          %s695 = sshll.u32 %s684, 4
          %s696 = int_to_ptr.vmem [resolvable:$true] %s695
          %698 = dma.vmem_to_hbm [thread:$0]  %s696, 128, %s693, %s681
        $region72: #{tpu_custom_call.1} parent=39 // pred_fallthru
          _
      $region40: #{tpu_custom_call.1} parent=5 // pred_fallthru
        _
      %p699 = scmp.le.s32.totalorder 2, %s16
      // Predicated region
      $region73: #{tpu_custom_call.1} parent=5 // pred_check
        %p700 = pneg %p699
      $region74: #{tpu_custom_call.1} parent=5 // pred_check_branch
        %702 = sbr.rel (%p700) target = $region76
      $region75: #{tpu_custom_call.1} parent=5 // pred_region
        %s703 = ssub.s32 %s16, 2
        // Predicated region
        $region77: #{tpu_custom_call.1} parent=75 // pred_check
          %p704 = pneg %p182
        $region78: #{tpu_custom_call.1} parent=75 // pred_check_branch
          %706 = sbr.rel (%p704) target = $region80
        $region79: #{tpu_custom_call.1} parent=75 // pred_region
          %s707 = sand.u32 %s167, 1
          %s708 = scalar_lea.sflag [#allocation9], %s707
          %s709 = sand.u32 %s167, 1
          %s710 = smul.addr %s709, 8
          %s711 = scalar_lea.vmem [#allocation13], %s710
          %712 = dma.done %s708, 128
        $region80: #{tpu_custom_call.1} parent=75 // pred_fallthru
          _
      $region76: #{tpu_custom_call.1} parent=5 // pred_fallthru
        _
    $region6: #{tpu_custom_call.1} parent=1 // loop_footer
      %s20 = sadd.s32 1, %s16
    $region7: #{tpu_custom_call.1} parent=1 // loop_footer_branch
      %15 = sbr.rel target = $region3
    $region8: #{tpu_custom_call.1} parent=1 // loop_exit
      _
    %713 = vsyncpa [#allocation8], 1
    %s714 = scalar_lea.sflag [#allocation8], 1
    %715 = vsyncpa %s714, 1
    %716 = vsyncpa [#allocation11], 1
    %717 = vsyncpa [#allocation9], 1
    %s718 = scalar_lea.sflag [#allocation9], 1
    %719 = vsyncpa %s718, 1

</llo_original>
